<compile_context>
chip_gen: v7x
topology: tpu7x:2x2x1
jax: 0.10.0
libtpu: 0.0.40
codegen_flags: <defaults>
</compile_context>

<pallas_src>
import jax
import jax.numpy as jnp
from jax.experimental import pallas as pl
from jax.experimental.pallas import tpu as pltpu

QMAX = 127.0   # INT quant: 2**(8-1) - 1


def _pair(output_size):
    if isinstance(output_size, (tuple, list)):
        return int(output_size[0]), int(output_size[1])
    return int(output_size), int(output_size)


def _round_up(v, m):
    return ((v + m - 1) // m) * m


def _sublane_multiple(dtype):
    # f32 -> 8, bf16 -> 16, int8/fp8 -> 32 (sub-32-bit dtypes pack along sublanes).
    return {4: 8, 2: 16, 1: 32}.get(jnp.dtype(dtype).itemsize, 8)


def _scale_from_minmax(t):
    # QParam.update + calcScaleZeroPoint: max clamped >= 0, min clamped <= 0,
    # scale = max(|max|, |min|) / qmax, zero_point = 0.  Computed in f32.
    t = t.astype(jnp.float32)
    mx = jnp.maximum(jnp.max(t), 0.0)
    mn = jnp.minimum(jnp.min(t), 0.0)
    return (jnp.maximum(mx, -mn) / QMAX).reshape(1)


def _pick_rows(m_rows, khw, in_dtype, budget_bytes=8 * 1024 * 1024):
    """Largest row-block R that
      * is a multiple of the dtype's sublane pack and divides m_rows,
      * keeps the *padded* per-step VMEM footprint (input block + f32 output block,
        lane dims rounded up to 128) under budget_bytes  (double-buffered by Pallas),
      * stays <= m_rows // 2 whenever possible so the grid has >= 2 program points
        (keeps both v7x TensorCores busy even at batch 1)."""
    itemsize = jnp.dtype(in_dtype).itemsize
    sub = _sublane_multiple(in_dtype)
    if m_rows % sub != 0:
        return m_rows                       # single full-array block (still legal)
    khw_pad = _round_up(max(khw, 1), 128)
    bytes_per_row = khw_pad * itemsize + 128 * 4   # padded input row + padded f32 out row
    max_rows = max(budget_bytes // bytes_per_row, sub)
    upper = m_rows if m_rows < 2 * sub else m_rows // 2
    upper = min(upper, max_rows)
    best = sub
    r = sub
    while r <= upper:
        if m_rows % r == 0:
            best = r
        r += sub
    return best


def fq_pool_kernel(si_ref, x_ref, o_ref):
    """FakeQuantize with the input scale (qi) fused with the window mean.

    x_ref block: (R, KHW)  rows = output pixels (sublane-dense), window on lanes.
    o_ref block: (R, 1)    one pooled value per row.
    """
    s = si_ref[0]                              # SMEM scalar: qi scale
    s_inv = 1.0 / s                            # one scalar reciprocal per block
    khw = x_ref.shape[-1]                      # static window size
    x = x_ref[...].astype(jnp.float32)         # f32 math regardless of input dtype
    q = jnp.round(jnp.clip(x * s_inv, -QMAX, QMAX))
    # Fold dequant scale and mean divisor past the reduction: one scalar multiply on
    # the (KHW-times smaller) row sums instead of a full-width multiply on x.
    o_ref[...] = (jnp.sum(q, axis=-1, keepdims=True) * (s * (1.0 / khw))).astype(o_ref.dtype)


def qadaptive_avg_pool2d_forward(x, output_size):
    N, C, H, W = x.shape
    oH, oW = _pair(output_size)
    if H % oH != 0 or W % oW != 0:
        # TODO(synk): adaptive_avg_pool2d with non-divisible (uneven) windows has no
        #             clean single-BlockSpec formulation; only the divisible case
        #             (including the common global-pooling case) is implemented.
        raise NotImplementedError("output_size must evenly divide the spatial dims")
    kh, kw = H // oH, W // oW
    KHW = kh * kw
    M = N * C * oH * oW                        # one row per pooled output element

    # qi scale: inherent full-tensor dependency -> plain-JAX glue reduction.
    si = _scale_from_minmax(x)                 # (1,) f32

    if oH == 1 and oW == 1:
        x2 = x.reshape(M, KHW)                 # global pooling: free reshape, no HBM pass
    else:
        # TODO(synk): fuse this relayout (and the si min/max) into a Pallas pass to
        #             avoid the extra HBM round-trip on the non-global path.
        x2 = jnp.transpose(
            x.reshape(N, C, oH, kh, oW, kw), (0, 1, 2, 4, 3, 5)
        ).reshape(M, KHW)

    R = _pick_rows(M, KHW, x.dtype)
    grid = (M // R,)

    pooled = pl.pallas_call(
        fq_pool_kernel,
        out_shape=jax.ShapeDtypeStruct((M, 1), jnp.float32),
        grid_spec=pltpu.PrefetchScalarGridSpec(
            num_scalar_prefetch=1,
            grid=grid,
            in_specs=[pl.BlockSpec((R, KHW), lambda i, si_r: (i, 0))],
            out_specs=pl.BlockSpec((R, 1), lambda i, si_r: (i, 0)),
        ),
        compiler_params=pltpu.CompilerParams(
            dimension_semantics=("parallel",),
            vmem_limit_bytes=32 * 1024 * 1024,   # headroom for double-buffered 8 MiB blocks
        ),
    )(si, x2)

    pooled = pooled.reshape(N, C, oH, oW)      # f32

    # qo update + FakeQuantize on the pooled tensor: KHW-times smaller than x, so a
    # tiny plain-jnp epilogue beats a dedicated pallas_call (per feedback).
    so = _scale_from_minmax(pooled)[0]
    out = so * jnp.round(jnp.clip(pooled / so, -QMAX, QMAX))
    return out.astype(x.dtype)


def qadaptive_avg_pool2d_reference(x, output_size):
    """Pure-JAX reference matching the PyTorch forward (division-based FakeQuantize)."""
    N, C, H, W = x.shape
    oH, oW = _pair(output_size)
    kh, kw = H // oH, W // oW
    xf = x.astype(jnp.float32)
    si = _scale_from_minmax(xf)[0]
    xq = si * jnp.round(jnp.clip(xf / si, -QMAX, QMAX))
    y = xq.reshape(N, C, oH, kh, oW, kw).mean(axis=(3, 5))
    so = _scale_from_minmax(y)[0]
    return (so * jnp.round(jnp.clip(y / so, -QMAX, QMAX))).astype(x.dtype)


if __name__ == "__main__":
    key = jax.random.PRNGKey(0)
    N, C, H, W = 2, 4, 16, 16
    x = jax.random.normal(key, (N, C, H, W), dtype=jnp.float32)

    # Case 1: global average pooling (the common output_size=1 use).
    out1 = jax.block_until_ready(qadaptive_avg_pool2d_forward(x, 1))
    ref1 = qadaptive_avg_pool2d_reference(x, 1)
    assert out1.shape == (N, C, 1, 1) and out1.dtype == x.dtype
    assert jnp.allclose(out1, ref1, atol=1e-5, rtol=1e-5)

    # Case 2: non-trivial output_size with divisible windows (exercises >=2 grid points).
    out2 = jax.block_until_ready(qadaptive_avg_pool2d_forward(x, (4, 4)))
    ref2 = qadaptive_avg_pool2d_reference(x, (4, 4))
    assert out2.shape == (N, C, 4, 4) and out2.dtype == x.dtype
    assert jnp.allclose(out2, ref2, atol=1e-5, rtol=1e-5)

    print("KERNEL_OK")
</pallas_src>

<mosaic_0001>
module attributes {stable_mosaic.version = 11 : i64} {
  func.func @fq_pool_kernel(%arg0: i32, %arg1: memref<1xf32, #tpu.memory_space<smem>>, %arg2: memref<8x256xf32, #tpu.memory_space<vmem>>, %arg3: memref<8x1xf32, #tpu.memory_space<vmem>>) attributes {dimension_semantics = [#tpu.dimension_semantics<parallel>], iteration_bounds = array<i64: 1>, scalar_prefetch = 1 : i64, scratch_operands = 0 : i64, tpu.core_type = #tpu.core_type<tc>, window_params = [{transform_indices = @transform_0, window_bounds = array<i64: 8, 256>}, {transform_indices = @transform_1, window_bounds = array<i64: 8, 1>}]} {
    %c0 = arith.constant 0 : index
    %0 = memref.load %arg1[%c0] : memref<1xf32, #tpu.memory_space<smem>>
    %cst = arith.constant 1.000000e+00 : f32
    %1 = arith.divf %cst, %0 : f32
    %c0_0 = arith.constant 0 : index
    %c0_1 = arith.constant 0 : index
    %2 = vector.load %arg2[%c0_0, %c0_1] : memref<8x256xf32, #tpu.memory_space<vmem>>, vector<8x256xf32>
    %3 = vector.broadcast %1 : f32 to vector<8x256xf32>
    %4 = arith.mulf %2, %3 : vector<8x256xf32>
    %cst_2 = arith.constant -1.270000e+02 : f32
    %cst_3 = arith.constant 1.270000e+02 : f32
    %5 = vector.broadcast %cst_2 : f32 to vector<8x256xf32>
    %6 = arith.maximumf %5, %4 : vector<8x256xf32>
    %7 = vector.broadcast %cst_3 : f32 to vector<8x256xf32>
    %8 = arith.minimumf %7, %6 : vector<8x256xf32>
    %9 = math.roundeven %8 : vector<8x256xf32>
    %cst_4 = arith.constant dense<0.000000e+00> : vector<8xf32>
    %10 = vector.multi_reduction <add>, %9, %cst_4 [1] : vector<8x256xf32> to vector<8xf32>
    %11 = vector.shape_cast %10 : vector<8xf32> to vector<8x1xf32>
    %cst_5 = arith.constant 3.906250e-03 : f32
    %12 = arith.mulf %0, %cst_5 : f32
    %13 = vector.broadcast %12 : f32 to vector<8x1xf32>
    %14 = arith.mulf %11, %13 : vector<8x1xf32>
    %c0_6 = arith.constant 0 : index
    %c0_7 = arith.constant 0 : index
    %15 = vector.load %arg3[%c0_6, %c0_7] : memref<8x1xf32, #tpu.memory_space<vmem>>, vector<8x1xf32>
    tpu.vector_store %arg3[%c0_6, %c0_7], %14 {strides = array<i32>} : memref<8x1xf32, #tpu.memory_space<vmem>>, vector<8x1xf32>,
    return
  }
  func.func @transform_0(%arg0: i32, %arg1: memref<1xf32, #tpu.memory_space<smem>>) -> (i32, i32) {
    %c0_i32 = arith.constant 0 : i32
    %c0_i32_0 = arith.constant 0 : i32
    return %arg0, %c0_i32 : i32, i32
  }
  func.func @transform_1(%arg0: i32, %arg1: memref<1xf32, #tpu.memory_space<smem>>) -> (i32, i32) {
    %c0_i32 = arith.constant 0 : i32
    %c0_i32_0 = arith.constant 0 : i32
    return %arg0, %c0_i32 : i32, i32
  }
}

</mosaic_0001>

<llo_original>
// kernel: tpu_custom_call.1
$region0: #{tpu_custom_call.1}
  #allocation0 [shape = 'u32[]', space=smem, size = 0x4, offset = 0x4, fixed_abs, tag = 'smem constant byte address 0x4 - core index']
  #allocation1 [shape = 'u32[144,128]{1,0:T(1,128)}', space=vmem, size = 0x12000, scoped, tag = 'internal scratch']
  #allocation2 [shape = 's32[1]{0}', space=sflag, size = 0x4, scoped, tag = 'scoped memory for tpu_custom_call.1']
  #allocation3 [shape = 'f32[1]{0:T(128)S(6)}', space=smem, size = 0x200, scoped, tag = 'prefetched SMEM operand 0']
  %s0 = inlined_call_operand.<no memory space> [shape: f32[1], index: 0, kind: input, shape index: {}]
  %s1 = inlined_call_operand.hbm [shape: f32[8,256], index: 1, kind: input, shape index: {}]
  %s2 = inlined_call_operand.vmem [shape: f32[8,1], index: 2, kind: output, shape index: {}]
  %s3 = sld [smem:[#allocation0]]
  $region18: #{tpu_custom_call.1} parent=0
    _
  %s5 = ssub.s32 1, %s3
  %s6 = scalar_select 0, %s5, %s3
  %7 = sst [smem:[#allocation3]] %s0
  $region1: #{tpu_custom_call.1} parent=0
    #allocation4 [shape = 'u8[8192]{0}', space=vmem, size = 0x2000, scoped, tag = 'input window, operand 1, single buffered']
    #allocation5 [shape = 's32[1]{0}', space=sflag, size = 0x4, scoped, tag = 'scoped memory for tpu_custom_call.1']
    %8 = vsyncpa [#allocation5], 0
    // Predicated region
    $region2: #{tpu_custom_call.1} parent=1 // pred_check
      _
    $region3: #{tpu_custom_call.1} parent=1 // pred_check_branch
      %10 = sbr.rel (0) target = $region5
    $region4: #{tpu_custom_call.1} parent=1 // pred_region
      %s12 = ssub.s32 256, 256
      %13 = vsyncadd [#allocation5], %s12
      %s15 = sshll.u32 [#allocation4], 4
      %s16 = int_to_ptr.vmem [resolvable:$true] %s15
      %18 = dma.hbm_to_vmem [thread:$0]  %s1, 256, %s16, [#allocation5]
    $region5: #{tpu_custom_call.1} parent=1 // pred_fallthru
      _
    // Predicated region
    $region6: #{tpu_custom_call.1} parent=1 // pred_check
      _
    $region7: #{tpu_custom_call.1} parent=1 // pred_check_branch
      %20 = sbr.rel (0) target = $region9
    $region8: #{tpu_custom_call.1} parent=1 // pred_region
      %21 = dma.done [#allocation5], 256
    $region9: #{tpu_custom_call.1} parent=1 // pred_fallthru
      _
    %s22 = sld [smem:[#allocation3]]
    %v23 = vstv %s22
    %v24 = vrcp.pop %v23
    %s25 = vtos %v24
    %v26 = vld [vmem:[#allocation4] sm:$0xff]
    %v27 = vld [vmem:[#allocation4 + $0x8] sm:$0xff]
    %v28 = vstv %s25
    %v29 = vmul.f32 %v26, %v28
    %v30 = vmul.f32 %v27, %v28
    %v31 = vmax.f32 %v29, -127.0
    %v32 = vmax.f32 %v30, -127.0
    %v33 = vmin.f32 %v31, 127.0
    %v34 = vmin.f32 %v32, 127.0
    %v35 = vround.ne.pseudo %v33
    %v36 = vround.ne.pseudo %v34
    %v37 = vadd.f32 %v35, %v36
    %38 = vadd.xlane.f32.xlu0 %v37
    %v39 = vpop.xlane.xlu0 %38
    %s40 = smul.f32 %s22, 0.00390625
    %v41 = vstv %s40
    %v42 = vmul.f32 %v39, %v41
    %vm43 = vcmask 7168
    %44 = vst.msk [vmem:[%s2] sm:$0xff] %vm43, %v42
    // Predicated region
    $region10: #{tpu_custom_call.1} parent=1 // pred_check
      _
    $region11: #{tpu_custom_call.1} parent=1 // pred_check_branch
      %46 = sbr.rel (0) target = $region13
    $region12: #{tpu_custom_call.1} parent=1 // pred_region
      _
    $region13: #{tpu_custom_call.1} parent=1 // pred_fallthru
      _
    // Predicated region
    $region14: #{tpu_custom_call.1} parent=1 // pred_check
      _
    $region15: #{tpu_custom_call.1} parent=1 // pred_check_branch
      %48 = sbr.rel (0) target = $region17
    $region16: #{tpu_custom_call.1} parent=1 // pred_region
      _
    $region17: #{tpu_custom_call.1} parent=1 // pred_fallthru
      _
    %49 = vsyncpa [#allocation5], 1

</llo_original>
